<compile_context>
chip_gen: v7x
topology: tpu7x:2x2x1
jax: 0.10.0
libtpu: 0.0.40
codegen_flags: <defaults>
</compile_context>

<pallas_src>
import jax
import jax.numpy as jnp
from jax.experimental import pallas as pl
from jax.experimental.pallas import tpu as pltpu


def _round_up(n, m):
    return ((n + m - 1) // m) * m


def _generator_kernel(x_ref, w1_ref, b1_ref, w2_ref, b2_ref, w3_ref, b3_ref, o_ref):
    # Fused 3-layer MLP on one batch tile.  Weights/biases are grid-invariant
    # (VMEM-resident across grid steps).  MXU operands are bf16; accumulation,
    # bias add, ReLU and tanh stay in f32.
    x = x_ref[...].astype(jnp.bfloat16)  # in-kernel f32 -> bf16 cast (VPU, free slot)

    # Layer 1: Linear(d_in, 128) + ReLU
    h1 = jnp.dot(x, w1_ref[...], preferred_element_type=jnp.float32) + b1_ref[...]
    h1 = jnp.maximum(h1, 0.0)

    # Layer 2: Linear(128, 256) + ReLU
    h2 = jnp.dot(h1.astype(jnp.bfloat16), w2_ref[...],
                 preferred_element_type=jnp.float32) + b2_ref[...]
    h2 = jnp.maximum(h2, 0.0)

    # Layer 3: Linear(256, d_out) + Tanh
    h3 = jnp.dot(h2.astype(jnp.bfloat16), w3_ref[...],
                 preferred_element_type=jnp.float32) + b3_ref[...]
    o_ref[...] = jnp.tanh(h3).astype(o_ref.dtype)


def prepare_generator_params(params):
    """One-time prep: cast weights to bf16 (MXU operands); biases stay f32.

    Call once and reuse across forward calls so the casts are not re-issued as
    separate XLA passes on every inference call.
    """
    bf = jnp.bfloat16
    return {
        "w1": params["w1"].astype(bf), "b1": params["b1"].astype(jnp.float32),
        "w2": params["w2"].astype(bf), "b2": params["b2"].astype(jnp.float32),
        "w3": params["w3"].astype(bf), "b3": params["b3"].astype(jnp.float32),
    }


def generator_forward(x, prepared, *, batch_tile=1024):
    """Run the Generator MLP as a single fused Pallas kernel.

    x: (B, input_dim) float32 (unpadded)
    prepared: output of prepare_generator_params (bf16 weights, f32 biases)
    Returns (B, output_dim) float32 — exact shape, no padding or slicing.
    """
    w1, b1 = prepared["w1"], prepared["b1"]
    w2, b2 = prepared["w2"], prepared["b2"]
    w3, b3 = prepared["w3"], prepared["b3"]
    B, d_in = x.shape
    d_out = w3.shape[1]

    # Batch tile: large (amortizes ~0.35us/step overhead, fills the MXU M dim),
    # multiple of 8 sublanes, clamped to the batch, and capped so the grid has
    # at least 2 steps when possible (keeps both v7x TensorCores busy).
    bt = min(batch_tile, _round_up(B, 8))
    if B >= 16:
        bt = min(bt, _round_up(pl.cdiv(B, 2), 8))
    bt = max(8, _round_up(bt, 8))

    # Ragged last block: out-of-bounds reads are unspecified, writes are masked.
    # There is no reduction across batch rows, so this is safe.
    grid = (pl.cdiv(B, bt),)

    # Grid-invariant block index => single VMEM-resident copy across all steps.
    full = lambda arr: pl.BlockSpec(arr.shape, lambda i: (0,) * arr.ndim)

    return pl.pallas_call(
        _generator_kernel,
        out_shape=jax.ShapeDtypeStruct((B, d_out), jnp.float32),
        grid_spec=pltpu.PrefetchScalarGridSpec(
            num_scalar_prefetch=0,
            grid=grid,
            in_specs=[
                pl.BlockSpec((bt, d_in), lambda i: (i, 0)),  # x tile, unpadded f32
                full(w1), full(b1),
                full(w2), full(b2),
                full(w3), full(b3),
            ],
            out_specs=pl.BlockSpec((bt, d_out), lambda i: (i, 0)),
        ),
        compiler_params=pltpu.CompilerParams(
            dimension_semantics=("parallel",),   # batch axis shards across TCs (v7x)
            vmem_limit_bytes=32 * 1024 * 1024,   # safe on v7x's 64 MiB VMEM, ample here
        ),
    )(x, w1, b1, w2, b2, w3, b3)


def init_generator_params(key, input_dim, output_dim):
    """Deterministic init mimicking torch.nn.Linear default (U(-1/sqrt(fan_in), +))."""
    def linear_init(k, fan_in, fan_out):
        kw, kb = jax.random.split(k)
        bound = 1.0 / jnp.sqrt(fan_in)
        w = jax.random.uniform(kw, (fan_in, fan_out), jnp.float32, -bound, bound)
        b = jax.random.uniform(kb, (1, fan_out), jnp.float32, -bound, bound)
        return w, b

    k1, k2, k3 = jax.random.split(key, 3)
    w1, b1 = linear_init(k1, input_dim, 128)
    w2, b2 = linear_init(k2, 128, 256)
    w3, b3 = linear_init(k3, 256, output_dim)
    return {"w1": w1, "b1": b1, "w2": w2, "b2": b2, "w3": w3, "b3": b3}


def _reference_forward_f32(x, p):
    h1 = jnp.maximum(x @ p["w1"] + p["b1"], 0.0)
    h2 = jnp.maximum(h1 @ p["w2"] + p["b2"], 0.0)
    return jnp.tanh(h2 @ p["w3"] + p["b3"])


def _reference_forward_bf16(x, p):
    # Matches the kernel's numerics: bf16 matmul operands, f32 accumulation/epilogue.
    bf = jnp.bfloat16
    h1 = jnp.maximum(
        jnp.dot(x.astype(bf), p["w1"].astype(bf),
                preferred_element_type=jnp.float32) + p["b1"], 0.0)
    h2 = jnp.maximum(
        jnp.dot(h1.astype(bf), p["w2"].astype(bf),
                preferred_element_type=jnp.float32) + p["b2"], 0.0)
    return jnp.tanh(
        jnp.dot(h2.astype(bf), p["w3"].astype(bf),
                preferred_element_type=jnp.float32) + p["b3"])


if __name__ == "__main__":
    key = jax.random.PRNGKey(0)
    k_params, k_x = jax.random.split(key)

    # Non-tile-multiple batch and non-128-multiple feature dims exercise the
    # ragged last block (masked writes) and the unpadded lane paths.
    batch, input_dim, output_dim = 300, 32, 64
    params = init_generator_params(k_params, input_dim, output_dim)
    prepared = prepare_generator_params(params)
    x = jax.random.normal(k_x, (batch, input_dim), jnp.float32)

    out = jax.block_until_ready(generator_forward(x, prepared))
    assert out.shape == (batch, output_dim)

    # Check vs. a reference with the same bf16-operand / f32-accum numerics
    # (tolerance allows for MXU vs. XLA accumulation-order differences).
    ref_bf16 = _reference_forward_bf16(x, params)
    assert jnp.allclose(out, ref_bf16, atol=5e-3, rtol=5e-3), "mismatch vs bf16-matmul reference"

    # Loose sanity check vs. full-f32 reference (bf16 operand rounding only).
    ref_f32 = _reference_forward_f32(x, params)
    assert jnp.allclose(out, ref_f32, atol=5e-2, rtol=5e-2), "mismatch vs f32 reference"

    # Tiny-batch path (single grid step, tile clamped to 8 rows).
    x_small = jax.random.normal(jax.random.PRNGKey(1), (8, input_dim), jnp.float32)
    out_small = jax.block_until_ready(generator_forward(x_small, prepared))
    assert out_small.shape == (8, output_dim)
    assert jnp.allclose(out_small, _reference_forward_bf16(x_small, params),
                        atol=5e-3, rtol=5e-3), "mismatch on tiny-batch path"

    print("KERNEL_OK")
</pallas_src>

<mosaic_0001>
module attributes {stable_mosaic.version = 11 : i64} {
  func.func @_generator_kernel(%arg0: i32, %arg1: memref<152x32xf32, #tpu.memory_space<vmem>>, %arg2: memref<32x128xbf16, #tpu.memory_space<vmem>>, %arg3: memref<1x128xf32, #tpu.memory_space<vmem>>, %arg4: memref<128x256xbf16, #tpu.memory_space<vmem>>, %arg5: memref<1x256xf32, #tpu.memory_space<vmem>>, %arg6: memref<256x64xbf16, #tpu.memory_space<vmem>>, %arg7: memref<1x64xf32, #tpu.memory_space<vmem>>, %arg8: memref<152x64xf32, #tpu.memory_space<vmem>>) attributes {dimension_semantics = [#tpu.dimension_semantics<parallel>], iteration_bounds = array<i64: 2>, scalar_prefetch = 0 : i64, scratch_operands = 0 : i64, tpu.core_type = #tpu.core_type<tc>, window_params = [{transform_indices = @transform_0, window_bounds = array<i64: 152, 32>}, {pipeline_mode = #tpu.pipeline_mode<synchronous>, transform_indices = @transform_1, window_bounds = array<i64: 32, 128>}, {pipeline_mode = #tpu.pipeline_mode<synchronous>, transform_indices = @transform_2, window_bounds = array<i64: 1, 128>}, {pipeline_mode = #tpu.pipeline_mode<synchronous>, transform_indices = @transform_3, window_bounds = array<i64: 128, 256>}, {pipeline_mode = #tpu.pipeline_mode<synchronous>, transform_indices = @transform_4, window_bounds = array<i64: 1, 256>}, {pipeline_mode = #tpu.pipeline_mode<synchronous>, transform_indices = @transform_5, window_bounds = array<i64: 256, 64>}, {pipeline_mode = #tpu.pipeline_mode<synchronous>, transform_indices = @transform_6, window_bounds = array<i64: 1, 64>}, {transform_indices = @transform_7, window_bounds = array<i64: 152, 64>}]} {
    %c0 = arith.constant 0 : index
    %c0_0 = arith.constant 0 : index
    %0 = vector.load %arg1[%c0, %c0_0] : memref<152x32xf32, #tpu.memory_space<vmem>>, vector<152x32xf32>
    %1 = arith.truncf %0 : vector<152x32xf32> to vector<152x32xbf16>
    %c0_1 = arith.constant 0 : index
    %c0_2 = arith.constant 0 : index
    %2 = vector.load %arg2[%c0_1, %c0_2] : memref<32x128xbf16, #tpu.memory_space<vmem>>, vector<32x128xbf16>
    %cst = arith.constant dense<0.000000e+00> : vector<152x128xf32>
    %3 = tpu.matmul %1, %2, %cst {dimension_numbers = #tpu.dot_dimension_numbers<[1], [0], [0], [1], [0, 0, 1, 1], [], []>} : vector<152x32xbf16>, vector<32x128xbf16>, vector<152x128xf32> -> vector<152x128xf32>
    %c0_3 = arith.constant 0 : index
    %c0_4 = arith.constant 0 : index
    %4 = vector.load %arg3[%c0_3, %c0_4] : memref<1x128xf32, #tpu.memory_space<vmem>>, vector<1x128xf32>
    %5 = vector.broadcast %4 : vector<1x128xf32> to vector<152x128xf32>
    %6 = arith.addf %3, %5 : vector<152x128xf32>
    %cst_5 = arith.constant 0.000000e+00 : f32
    %7 = vector.broadcast %cst_5 : f32 to vector<152x128xf32>
    %8 = arith.maximumf %6, %7 : vector<152x128xf32>
    %9 = arith.truncf %8 : vector<152x128xf32> to vector<152x128xbf16>
    %c0_6 = arith.constant 0 : index
    %c0_7 = arith.constant 0 : index
    %10 = vector.load %arg4[%c0_6, %c0_7] : memref<128x256xbf16, #tpu.memory_space<vmem>>, vector<128x256xbf16>
    %cst_8 = arith.constant dense<0.000000e+00> : vector<152x256xf32>
    %11 = tpu.matmul %9, %10, %cst_8 {dimension_numbers = #tpu.dot_dimension_numbers<[1], [0], [0], [1], [0, 0, 1, 1], [], []>} : vector<152x128xbf16>, vector<128x256xbf16>, vector<152x256xf32> -> vector<152x256xf32>
    %c0_9 = arith.constant 0 : index
    %c0_10 = arith.constant 0 : index
    %12 = vector.load %arg5[%c0_9, %c0_10] : memref<1x256xf32, #tpu.memory_space<vmem>>, vector<1x256xf32>
    %13 = vector.broadcast %12 : vector<1x256xf32> to vector<152x256xf32>
    %14 = arith.addf %11, %13 : vector<152x256xf32>
    %cst_11 = arith.constant 0.000000e+00 : f32
    %15 = vector.broadcast %cst_11 : f32 to vector<152x256xf32>
    %16 = arith.maximumf %14, %15 : vector<152x256xf32>
    %17 = arith.truncf %16 : vector<152x256xf32> to vector<152x256xbf16>
    %c0_12 = arith.constant 0 : index
    %c0_13 = arith.constant 0 : index
    %18 = vector.load %arg6[%c0_12, %c0_13] : memref<256x64xbf16, #tpu.memory_space<vmem>>, vector<256x64xbf16>
    %cst_14 = arith.constant dense<0.000000e+00> : vector<152x64xf32>
    %19 = tpu.matmul %17, %18, %cst_14 {dimension_numbers = #tpu.dot_dimension_numbers<[1], [0], [0], [1], [0, 0, 1, 1], [], []>} : vector<152x256xbf16>, vector<256x64xbf16>, vector<152x64xf32> -> vector<152x64xf32>
    %c0_15 = arith.constant 0 : index
    %c0_16 = arith.constant 0 : index
    %20 = vector.load %arg7[%c0_15, %c0_16] : memref<1x64xf32, #tpu.memory_space<vmem>>, vector<1x64xf32>
    %21 = vector.broadcast %20 : vector<1x64xf32> to vector<152x64xf32>
    %22 = arith.addf %19, %21 : vector<152x64xf32>
    %23 = math.tanh %22 : vector<152x64xf32>
    %c0_17 = arith.constant 0 : index
    %c0_18 = arith.constant 0 : index
    %24 = vector.load %arg8[%c0_17, %c0_18] : memref<152x64xf32, #tpu.memory_space<vmem>>, vector<152x64xf32>
    tpu.vector_store %arg8[%c0_17, %c0_18], %23 {strides = array<i32>} : memref<152x64xf32, #tpu.memory_space<vmem>>, vector<152x64xf32>,
    return
  }
  func.func @transform_0(%arg0: i32) -> (i32, i32) {
    %c0_i32 = arith.constant 0 : i32
    %c0_i32_0 = arith.constant 0 : i32
    return %arg0, %c0_i32 : i32, i32
  }
  func.func @transform_1(%arg0: i32) -> (i32, i32) {
    %c0_i32 = arith.constant 0 : i32
    %c0_i32_0 = arith.constant 0 : i32
    %c0_i32_1 = arith.constant 0 : i32
    return %c0_i32, %c0_i32_0 : i32, i32
  }
  func.func @transform_2(%arg0: i32) -> (i32, i32) {
    %c0_i32 = arith.constant 0 : i32
    %c0_i32_0 = arith.constant 0 : i32
    %c0_i32_1 = arith.constant 0 : i32
    return %c0_i32, %c0_i32_0 : i32, i32
  }
  func.func @transform_3(%arg0: i32) -> (i32, i32) {
    %c0_i32 = arith.constant 0 : i32
    %c0_i32_0 = arith.constant 0 : i32
    %c0_i32_1 = arith.constant 0 : i32
    return %c0_i32, %c0_i32_0 : i32, i32
  }
  func.func @transform_4(%arg0: i32) -> (i32, i32) {
    %c0_i32 = arith.constant 0 : i32
    %c0_i32_0 = arith.constant 0 : i32
    %c0_i32_1 = arith.constant 0 : i32
    return %c0_i32, %c0_i32_0 : i32, i32
  }
  func.func @transform_5(%arg0: i32) -> (i32, i32) {
    %c0_i32 = arith.constant 0 : i32
    %c0_i32_0 = arith.constant 0 : i32
    %c0_i32_1 = arith.constant 0 : i32
    return %c0_i32, %c0_i32_0 : i32, i32
  }
  func.func @transform_6(%arg0: i32) -> (i32, i32) {
    %c0_i32 = arith.constant 0 : i32
    %c0_i32_0 = arith.constant 0 : i32
    %c0_i32_1 = arith.constant 0 : i32
    return %c0_i32, %c0_i32_0 : i32, i32
  }
  func.func @transform_7(%arg0: i32) -> (i32, i32) {
    %c0_i32 = arith.constant 0 : i32
    %c0_i32_0 = arith.constant 0 : i32
    return %arg0, %c0_i32 : i32, i32
  }
}

</mosaic_0001>

<llo_original>
// kernel: tpu_custom_call.1
$region0: #{tpu_custom_call.1}
  #allocation0 [shape = 'u32[]', space=smem, size = 0x4, offset = 0x4, fixed_abs, tag = 'smem constant byte address 0x4 - core index']
  #allocation1 [shape = 'u32[144,128]{1,0:T(1,128)}', space=vmem, size = 0x12000, scoped, tag = 'internal scratch']
  %s0 = inlined_call_operand.vmem [shape: f32[300,32], index: 0, kind: input, shape index: {}]
  %s1 = inlined_call_operand.vmem [shape: bf16[32,128], index: 1, kind: input, shape index: {}]
  %s2 = inlined_call_operand.vmem [shape: f32[1,128], index: 2, kind: input, shape index: {}]
  %s3 = inlined_call_operand.vmem [shape: bf16[128,256], index: 3, kind: input, shape index: {}]
  %s4 = inlined_call_operand.vmem [shape: f32[1,256], index: 4, kind: input, shape index: {}]
  %s5 = inlined_call_operand.vmem [shape: bf16[256,64], index: 5, kind: input, shape index: {}]
  %s6 = inlined_call_operand.vmem [shape: f32[1,64], index: 6, kind: input, shape index: {}]
  %s7 = inlined_call_operand.vmem [shape: f32[300,64], index: 7, kind: output, shape index: {}]
  %s8 = sld [smem:[#allocation0]]
  $region61: #{tpu_custom_call.1} parent=0
    _
  %s10 = ssub.s32 1, %s8
  %s11 = scalar_select 0, %s10, %s8
  loop: start=0, step=1, limit=4
  $region2: #{tpu_custom_call.1} parent=0 // loop_pre_header
    _
  $region3: #{tpu_custom_call.1} parent=0 // loop_header
    %s13 = sphi 0, %s17
    %p14 = scmp.ge.s32.totalorder %s13, 4
    %s23 = sphi 0, %s25
    %s26 = sphi 0, %s23
    %s27 = sphi 0, %s26
    %s43 = sphi 0, %s27
    %s47 = sphi 0, %s47
    %s49 = sphi 0, %s47
    %s50 = sphi 0, %s49
    %s64 = sphi 0, %s50
    %s68 = sphi 0, %s68
    %s70 = sphi 0, %s68
    %s71 = sphi 0, %s70
    %s85 = sphi 0, %s71
    %s89 = sphi 0, %s89
    %s91 = sphi 0, %s89
    %s92 = sphi 0, %s91
    %s106 = sphi 0, %s92
    %s110 = sphi 0, %s110
    %s112 = sphi 0, %s110
    %s113 = sphi 0, %s112
    %s127 = sphi 0, %s113
    %s131 = sphi 0, %s131
    %s133 = sphi 0, %s131
    %s134 = sphi 0, %s133
    %s148 = sphi 0, %s134
    %s152 = sphi 0, %s152
    %s154 = sphi 0, %s152
    %s155 = sphi 0, %s154
    %s169 = sphi 0, %s155
    %s175 = sphi 0, %s177
    %s178 = sphi 0, %s175
    %s179 = sphi 0, %s178
    %s195 = sphi 0, %s179
  $region4: #{tpu_custom_call.1} parent=0 // loop_header_branch
    %16 = sbr.rel (%p14) target = $region8
  $region5: #{tpu_custom_call.1} parent=0 // loop_body
    %s18 = ssub.s32 %s13, 1
    %s19 = ssub.s32 %s13, 2
    %s20 = sadd.s32 %s13, 1
    %s21 = ssub.s32 %s13, %s20
    %p22 = scmp.eq.s32.totalorder %s21, 0
    %s24 = sadd.s32 %s23, 1
    %s25 = scalar_select %p22, %s23, %s24
    %p28 = pneg %p22
    %p29 = scmp.eq.s32.totalorder %s13, 1
    %p30 = por %p28, %p29
    %p31 = scmp.ne.s32.totalorder %s23, %s26
    %p32 = scmp.eq.s32.totalorder %s13, 0
    %p33 = por %p31, %p32
    %p34 = scmp.ne.s32.totalorder %s23, %s26
    %p35 = scmp.eq.s32.totalorder %s18, 1
    %p36 = por %p34, %p35
    %p37 = scmp.ne.s32.totalorder %s26, %s27
    %p38 = scmp.eq.s32.totalorder %s18, 0
    %p39 = por %p37, %p38
    %p40 = scmp.ne.s32.totalorder %s26, %s27
    %p41 = scmp.eq.s32.totalorder %s19, 1
    %p42 = por %p40, %p41
    %p44 = scmp.ne.s32.totalorder %s27, %s43
    %p45 = scmp.eq.s32.totalorder %s19, 0
    %p46 = por %p44, %p45
    %s48 = sadd.s32 %s47, 1
    %p51 = scmp.eq.s32.totalorder %s13, 1
    %p52 = scmp.ne.s32.totalorder %s47, %s49
    %p53 = scmp.eq.s32.totalorder %s13, 0
    %p54 = por %p52, %p53
    %p55 = scmp.ne.s32.totalorder %s47, %s49
    %p56 = scmp.eq.s32.totalorder %s18, 1
    %p57 = por %p55, %p56
    %p58 = scmp.ne.s32.totalorder %s49, %s50
    %p59 = scmp.eq.s32.totalorder %s18, 0
    %p60 = por %p58, %p59
    %p61 = scmp.ne.s32.totalorder %s49, %s50
    %p62 = scmp.eq.s32.totalorder %s19, 1
    %p63 = por %p61, %p62
    %p65 = scmp.ne.s32.totalorder %s50, %s64
    %p66 = scmp.eq.s32.totalorder %s19, 0
    %p67 = por %p65, %p66
    %s69 = sadd.s32 %s68, 1
    %p72 = scmp.eq.s32.totalorder %s13, 1
    %p73 = scmp.ne.s32.totalorder %s68, %s70
    %p74 = scmp.eq.s32.totalorder %s13, 0
    %p75 = por %p73, %p74
    %p76 = scmp.ne.s32.totalorder %s68, %s70
    %p77 = scmp.eq.s32.totalorder %s18, 1
    %p78 = por %p76, %p77
    %p79 = scmp.ne.s32.totalorder %s70, %s71
    %p80 = scmp.eq.s32.totalorder %s18, 0
    %p81 = por %p79, %p80
    %p82 = scmp.ne.s32.totalorder %s70, %s71
    %p83 = scmp.eq.s32.totalorder %s19, 1
    %p84 = por %p82, %p83
    %p86 = scmp.ne.s32.totalorder %s71, %s85
    %p87 = scmp.eq.s32.totalorder %s19, 0
    %p88 = por %p86, %p87
    %s90 = sadd.s32 %s89, 1
    %p93 = scmp.eq.s32.totalorder %s13, 1
    %p94 = scmp.ne.s32.totalorder %s89, %s91
    %p95 = scmp.eq.s32.totalorder %s13, 0
    %p96 = por %p94, %p95
    %p97 = scmp.ne.s32.totalorder %s89, %s91
    %p98 = scmp.eq.s32.totalorder %s18, 1
    %p99 = por %p97, %p98
    %p100 = scmp.ne.s32.totalorder %s91, %s92
    %p101 = scmp.eq.s32.totalorder %s18, 0
    %p102 = por %p100, %p101
    %p103 = scmp.ne.s32.totalorder %s91, %s92
    %p104 = scmp.eq.s32.totalorder %s19, 1
    %p105 = por %p103, %p104
    %p107 = scmp.ne.s32.totalorder %s92, %s106
    %p108 = scmp.eq.s32.totalorder %s19, 0
    %p109 = por %p107, %p108
    %s111 = sadd.s32 %s110, 1
    %p114 = scmp.eq.s32.totalorder %s13, 1
    %p115 = scmp.ne.s32.totalorder %s110, %s112
    %p116 = scmp.eq.s32.totalorder %s13, 0
    %p117 = por %p115, %p116
    %p118 = scmp.ne.s32.totalorder %s110, %s112
    %p119 = scmp.eq.s32.totalorder %s18, 1
    %p120 = por %p118, %p119
    %p121 = scmp.ne.s32.totalorder %s112, %s113
    %p122 = scmp.eq.s32.totalorder %s18, 0
    %p123 = por %p121, %p122
    %p124 = scmp.ne.s32.totalorder %s112, %s113
    %p125 = scmp.eq.s32.totalorder %s19, 1
    %p126 = por %p124, %p125
    %p128 = scmp.ne.s32.totalorder %s113, %s127
    %p129 = scmp.eq.s32.totalorder %s19, 0
    %p130 = por %p128, %p129
    %s132 = sadd.s32 %s131, 1
    %p135 = scmp.eq.s32.totalorder %s13, 1
    %p136 = scmp.ne.s32.totalorder %s131, %s133
    %p137 = scmp.eq.s32.totalorder %s13, 0
    %p138 = por %p136, %p137
    %p139 = scmp.ne.s32.totalorder %s131, %s133
    %p140 = scmp.eq.s32.totalorder %s18, 1
    %p141 = por %p139, %p140
    %p142 = scmp.ne.s32.totalorder %s133, %s134
    %p143 = scmp.eq.s32.totalorder %s18, 0
    %p144 = por %p142, %p143
    %p145 = scmp.ne.s32.totalorder %s133, %s134
    %p146 = scmp.eq.s32.totalorder %s19, 1
    %p147 = por %p145, %p146
    %p149 = scmp.ne.s32.totalorder %s134, %s148
    %p150 = scmp.eq.s32.totalorder %s19, 0
    %p151 = por %p149, %p150
    %s153 = sadd.s32 %s152, 1
    %p156 = scmp.eq.s32.totalorder %s13, 1
    %p157 = scmp.ne.s32.totalorder %s152, %s154
    %p158 = scmp.eq.s32.totalorder %s13, 0
    %p159 = por %p157, %p158
    %p160 = scmp.ne.s32.totalorder %s152, %s154
    %p161 = scmp.eq.s32.totalorder %s18, 1
    %p162 = por %p160, %p161
    %p163 = scmp.ne.s32.totalorder %s154, %s155
    %p164 = scmp.eq.s32.totalorder %s18, 0
    %p165 = por %p163, %p164
    %p166 = scmp.ne.s32.totalorder %s154, %s155
    %p167 = scmp.eq.s32.totalorder %s19, 1
    %p168 = por %p166, %p167
    %p170 = scmp.ne.s32.totalorder %s155, %s169
    %p171 = scmp.eq.s32.totalorder %s19, 0
    %p172 = por %p170, %p171
    %s173 = ssub.s32 %s13, %s20
    %p174 = scmp.eq.s32.totalorder %s173, 0
    %s176 = sadd.s32 %s175, 1
    %s177 = scalar_select %p174, %s175, %s176
    %p180 = pneg %p174
    %p181 = scmp.eq.s32.totalorder %s13, 1
    %p182 = por %p180, %p181
    %p183 = scmp.ne.s32.totalorder %s175, %s178
    %p184 = scmp.eq.s32.totalorder %s13, 0
    %p185 = por %p183, %p184
    %p186 = scmp.ne.s32.totalorder %s175, %s178
    %p187 = scmp.eq.s32.totalorder %s18, 1
    %p188 = por %p186, %p187
    %p189 = scmp.ne.s32.totalorder %s178, %s179
    %p190 = scmp.eq.s32.totalorder %s18, 0
    %p191 = por %p189, %p190
    %p192 = scmp.ne.s32.totalorder %s178, %s179
    %p193 = scmp.eq.s32.totalorder %s19, 1
    %p194 = por %p192, %p193
    %p196 = scmp.ne.s32.totalorder %s179, %s195
    %p197 = scmp.eq.s32.totalorder %s19, 0
    %p198 = por %p196, %p197
    %p199 = scmp.le.s32.totalorder 1, %s13
    %p200 = scmp.lt.s32.totalorder %s13, 3
    %p201 = pnand %p199, %p200
    %p202 = pneg %p201
    // Predicated region
    $region9: #{tpu_custom_call.1} parent=5 // pred_check
      _
    $region10: #{tpu_custom_call.1} parent=5 // pred_check_branch
      %204 = sbr.rel (%p201) target = $region12
    $region11: #{tpu_custom_call.1} parent=5 // pred_region
      %s205 = ssub.s32 %s13, 1
      // Predicated region
      $region13: #{tpu_custom_call.1} parent=11 // pred_check
        %p206 = pneg %p60
      $region14: #{tpu_custom_call.1} parent=11 // pred_check_branch
        %208 = sbr.rel (%p206) target = $region16
      $region15: #{tpu_custom_call.1} parent=11 // pred_region
        _
      $region16: #{tpu_custom_call.1} parent=11 // pred_fallthru
        _
      // Predicated region
      $region17: #{tpu_custom_call.1} parent=11 // pred_check
        %p209 = pneg %p81
      $region18: #{tpu_custom_call.1} parent=11 // pred_check_branch
        %211 = sbr.rel (%p209) target = $region20
      $region19: #{tpu_custom_call.1} parent=11 // pred_region
        _
      $region20: #{tpu_custom_call.1} parent=11 // pred_fallthru
        _
      // Predicated region
      $region21: #{tpu_custom_call.1} parent=11 // pred_check
        %p212 = pneg %p102
      $region22: #{tpu_custom_call.1} parent=11 // pred_check_branch
        %214 = sbr.rel (%p212) target = $region24
      $region23: #{tpu_custom_call.1} parent=11 // pred_region
        _
      $region24: #{tpu_custom_call.1} parent=11 // pred_fallthru
        _
      // Predicated region
      $region25: #{tpu_custom_call.1} parent=11 // pred_check
        %p215 = pneg %p123
      $region26: #{tpu_custom_call.1} parent=11 // pred_check_branch
        %217 = sbr.rel (%p215) target = $region28
      $region27: #{tpu_custom_call.1} parent=11 // pred_region
        _
      $region28: #{tpu_custom_call.1} parent=11 // pred_fallthru
        _
      // Predicated region
      $region29: #{tpu_custom_call.1} parent=11 // pred_check
        %p218 = pneg %p144
      $region30: #{tpu_custom_call.1} parent=11 // pred_check_branch
        %220 = sbr.rel (%p218) target = $region32
      $region31: #{tpu_custom_call.1} parent=11 // pred_region
        _
      $region32: #{tpu_custom_call.1} parent=11 // pred_fallthru
        _
      // Predicated region
      $region33: #{tpu_custom_call.1} parent=11 // pred_check
        %p221 = pneg %p165
      $region34: #{tpu_custom_call.1} parent=11 // pred_check_branch
        %223 = sbr.rel (%p221) target = $region36
      $region35: #{tpu_custom_call.1} parent=11 // pred_region
        _
      $region36: #{tpu_custom_call.1} parent=11 // pred_fallthru
        _
    $region12: #{tpu_custom_call.1} parent=5 // pred_fallthru
      _
    %p224 = scmp.lt.s32.totalorder %s13, 2
    // Predicated region
    $region37: #{tpu_custom_call.1} parent=5 // pred_check
      %p225 = pneg %p224
    $region38: #{tpu_custom_call.1} parent=5 // pred_check_branch
      %227 = sbr.rel (%p225) target = $region40
    $region39: #{tpu_custom_call.1} parent=5 // pred_region
      // Predicated region
      $region41: #{tpu_custom_call.1} parent=39 // pred_check
        %p228 = pneg %p33
      $region42: #{tpu_custom_call.1} parent=39 // pred_check_branch
        %230 = sbr.rel (%p228) target = $region44
      $region43: #{tpu_custom_call.1} parent=39 // pred_region
        %s231 = smul.u32 19, %s13
        %p232 = scmp.lt.s32.totalorder %s231, 37
        %s233 = scalar_select %p232, %s231, 37
        %s234 = smul.addr %s233, 8
        %s235 = scalar_lea.vmem %s0, %s234
        %s236 = smul.u32 19, %s13
      $region44: #{tpu_custom_call.1} parent=39 // pred_fallthru
        _
    $region40: #{tpu_custom_call.1} parent=5 // pred_fallthru
      _
    %p237 = scmp.le.s32.totalorder 1, %s13
    %p238 = scmp.lt.s32.totalorder %s13, 3
    %p239 = pnand %p237, %p238
    %p240 = pneg %p239
    // Predicated region
    $region45: #{tpu_custom_call.1} parent=5 // pred_check
      _
    $region46: #{tpu_custom_call.1} parent=5 // pred_check_branch
      %242 = sbr.rel (%p239) target = $region48
    $region47: #{tpu_custom_call.1} parent=5 // pred_region
      %s243 = ssub.s32 %s13, 1
      %s244 = smul.u32 19, %s18
      %p245 = scmp.lt.s32.totalorder %s244, 37
      %s246 = scalar_select %p245, %s244, 37
      %s247 = smul.addr %s246, 8
      %s248 = scalar_lea.vmem %s0, %s247
      %p249 = pneg %p39
      %p250 = pneg %p36
      %p251 = pneg %p60
      %p252 = pneg %p57
      %p253 = pneg %p81
      %p254 = pneg %p78
      %p255 = pneg %p102
      %p256 = pneg %p99
      %p257 = pneg %p123
      %p258 = pneg %p120
      %p259 = pneg %p144
      %p260 = pneg %p141
      %p261 = pneg %p165
      %p262 = pneg %p162
      %p263 = pneg %p191
      %p264 = pneg %p188
      %s265 = smul.u32 19, %s18
      %p266 = scmp.lt.s32.totalorder %s265, 37
      %s267 = scalar_select %p266, %s265, 37
      %s268 = smul.addr %s267, 8
      %s269 = scalar_lea.vmem %s7, %s268
      %s270 = smul.u32 19, %s18
      %p271 = scmp.lt.s32.totalorder %s270, 37
      %s272 = scalar_select %p271, %s270, 37
      %s273 = smul.addr %s272, 8
      %s274 = scalar_lea.vmem %s0, %s273
      %s275 = smul.u32 19, %s18
      %s276 = smul.u32 19, %s18
      %p277 = scmp.lt.s32.totalorder %s276, 37
      %s278 = scalar_select %p277, %s276, 37
      %s279 = smul.addr %s278, 8
      %s280 = scalar_lea.vmem %s7, %s279
      %s281 = smul.u32 19, %s18
      %v283 = vld [vmem:[%s274] sm:$0xff]
      %v284 = vld [vmem:[%s274 + $0x8] sm:$0xff]
      %v285 = vld [vmem:[%s274 + $0x10] sm:$0xff]
      %v286 = vld [vmem:[%s274 + $0x18] sm:$0xff]
      %v287 = vld [vmem:[%s274 + $0x20] sm:$0xff]
      %v288 = vld [vmem:[%s274 + $0x28] sm:$0xff]
      %v289 = vld [vmem:[%s274 + $0x30] sm:$0xff]
      %v290 = vld [vmem:[%s274 + $0x38] sm:$0xff]
      %v291 = vld [vmem:[%s274 + $0x40] sm:$0xff]
      %v292 = vld [vmem:[%s274 + $0x48] sm:$0xff]
      %v293 = vld [vmem:[%s274 + $0x50] sm:$0xff]
      %v294 = vld [vmem:[%s274 + $0x58] sm:$0xff]
      %v295 = vld [vmem:[%s274 + $0x60] sm:$0xff]
      %v296 = vld [vmem:[%s274 + $0x68] sm:$0xff]
      %v297 = vld [vmem:[%s274 + $0x70] sm:$0xff]
      %v298 = vld [vmem:[%s274 + $0x78] sm:$0xff]
      %v299 = vld [vmem:[%s274 + $0x80] sm:$0xff]
      %v300 = vld [vmem:[%s274 + $0x88] sm:$0xff]
      %v301 = vld [vmem:[%s274 + $0x90] sm:$0xff]
      %v302 = vpack.c.bf16 %v284, %v283
      %v303 = vpack.c.bf16 %v286, %v285
      %v304 = vpack.c.bf16 %v288, %v287
      %v305 = vpack.c.bf16 %v290, %v289
      %v306 = vpack.c.bf16 %v292, %v291
      %v307 = vpack.c.bf16 %v294, %v293
      %v308 = vpack.c.bf16 %v296, %v295
      %v309 = vpack.c.bf16 %v298, %v297
      %v310 = vpack.c.bf16 %v300, %v299
      %v311 = vpack.c.bf16 %v301, %v301
      %v312 = vld [vmem:[%s1] sm:$0xf]
      %v313 = vld [vmem:[%s1 + $0x4] sm:$0xf]
      %v314 = vld [vmem:[%s1 + $0x8] sm:$0xf]
      %v315 = vld [vmem:[%s1 + $0xc] sm:$0xf]
      %v316 = vld [vmem:[%s2] sm:$0x1]
      %v318 = vlaneseq
      %v319 = vshrl.u32 %v318, 7
      %v320 = vsub.s32 0, %v319
      %v321 = vrot.slane %v316, %v320
      %v327 = vunpack.c.l.b16 %v312
      %v328 = vunpack.c.l.b16 %v313
      %v329 = vunpack.c.l.b16 %v314
      %v330 = vunpack.c.l.b16 %v315
      %v331 = vpack.c.b16 %v328, %v327
      %v332 = vpack.c.b16 %v330, %v329
      %vm335 = vcmask 261120
      %v337 = vsel %vm335, %v302, 0
      %v340 = vsel %vm335, %v303, 0
      %v343 = vsel %vm335, %v304, 0
      %v346 = vsel %vm335, %v305, 0
      %v349 = vsel %vm335, %v306, 0
      %v352 = vsel %vm335, %v307, 0
      %v355 = vsel %vm335, %v308, 0
      %v358 = vsel %vm335, %v309, 0
      %v361 = vsel %vm335, %v310, 0
      %v364 = vsel %vm335, %v311, 0
      %366 = vmatprep.subr.bf16.mxu0 0
      %367 = vmatpush1.bf16.msra.mxu0 %v331
      %368 = vmatprep.subr.bf16.mxu0 0
      %369 = vmatpush1.bf16.msra.mxu0 %v332
      %370 = vmatprep.subr.bf16.mxu0 0
      %371 = vmatpush1.bf16.msra.mxu0 0
      %372 = vmatprep.subr.bf16.mxu0 0
      %373 = vmatpush1.bf16.msra.mxu0 0
      %374 = vmatprep.subr.bf16.mxu0 0
      %375 = vmatpush1.bf16.msra.mxu0 0
      %376 = vmatprep.subr.bf16.mxu0 0
      %377 = vmatpush1.bf16.msra.mxu0 0
      %378 = vmatprep.subr.bf16.mxu0 0
      %379 = vmatpush1.bf16.msra.mxu0 0
      %380 = vmatprep.subr.bf16.mxu0 0
      %381 = vmatpush1.bf16.msra.mxu0 0
      %382 = vmatprep.subr.bf16.mxu0 0
      %383 = vmatpush1.bf16.msra.mxu0 0
      %384 = vmatprep.subr.bf16.mxu0 0
      %385 = vmatpush1.bf16.msra.mxu0 0
      %386 = vmatprep.subr.bf16.mxu0 0
      %387 = vmatpush1.bf16.msra.mxu0 0
      %388 = vmatprep.subr.bf16.mxu0 0
      %389 = vmatpush1.bf16.msra.mxu0 0
      %390 = vmatprep.subr.bf16.mxu0 0
      %391 = vmatpush1.bf16.msra.mxu0 0
      %392 = vmatprep.subr.bf16.mxu0 0
      %393 = vmatpush1.bf16.msra.mxu0 0
      %394 = vmatprep.subr.bf16.mxu0 0
      %395 = vmatpush1.bf16.msra.mxu0 0
      %396 = vmatprep.subr.bf16.mxu0 0
      %397 = vmatpush1.bf16.msra.mxu0 0
      %398 = vmatprep.mubr.bf16.mxu0 0
      %399 = vmatmul.mubr.bf16.gmra.mrb[0].mxu0 %v337
      %v400 = vpop.f32.mrb[0].mxu0
      %v401 = vadd.f32 %v321, %v400
      %v402 = vpop.f32.mrb[0].mxu0
      %v403 = vpop.f32.mrb[0].mxu0
      %v404 = vadd.f32 %v321, %v403
      %v405 = vpop.f32.mrb[0].mxu0
      %406 = vmatprep.mubr.bf16.mxu0 0
      %407 = vmatmul.mubr.bf16.gmra.mrb[0].mxu0 %v340
      %v408 = vpop.f32.mrb[0].mxu0
      %v409 = vadd.f32 %v321, %v408
      %v410 = vpop.f32.mrb[0].mxu0
      %v411 = vpop.f32.mrb[0].mxu0
      %v412 = vadd.f32 %v321, %v411
      %v413 = vpop.f32.mrb[0].mxu0
      %414 = vmatprep.mubr.bf16.mxu0 0
      %415 = vmatmul.mubr.bf16.gmra.mrb[0].mxu0 %v343
      %v416 = vpop.f32.mrb[0].mxu0
      %v417 = vadd.f32 %v321, %v416
      %v418 = vpop.f32.mrb[0].mxu0
      %v419 = vpop.f32.mrb[0].mxu0
      %v420 = vadd.f32 %v321, %v419
      %v421 = vpop.f32.mrb[0].mxu0
      %422 = vmatprep.mubr.bf16.mxu0 0
      %423 = vmatmul.mubr.bf16.gmra.mrb[0].mxu0 %v346
      %v424 = vpop.f32.mrb[0].mxu0
      %v425 = vadd.f32 %v321, %v424
      %v426 = vpop.f32.mrb[0].mxu0
      %v427 = vpop.f32.mrb[0].mxu0
      %v428 = vadd.f32 %v321, %v427
      %v429 = vpop.f32.mrb[0].mxu0
      %430 = vmatprep.mubr.bf16.mxu0 0
      %431 = vmatmul.mubr.bf16.gmra.mrb[0].mxu0 %v349
      %v432 = vpop.f32.mrb[0].mxu0
      %v433 = vadd.f32 %v321, %v432
      %v434 = vpop.f32.mrb[0].mxu0
      %v435 = vpop.f32.mrb[0].mxu0
      %v436 = vadd.f32 %v321, %v435
      %v437 = vpop.f32.mrb[0].mxu0
      %438 = vmatprep.mubr.bf16.mxu0 0
      %439 = vmatmul.mubr.bf16.gmra.mrb[0].mxu0 %v352
      %v440 = vpop.f32.mrb[0].mxu0
      %v441 = vadd.f32 %v321, %v440
      %v442 = vpop.f32.mrb[0].mxu0
      %v443 = vpop.f32.mrb[0].mxu0
      %v444 = vadd.f32 %v321, %v443
      %v445 = vpop.f32.mrb[0].mxu0
      %446 = vmatprep.mubr.bf16.mxu0 0
      %447 = vmatmul.mubr.bf16.gmra.mrb[0].mxu0 %v355
      %v448 = vpop.f32.mrb[0].mxu0
      %v449 = vadd.f32 %v321, %v448
      %v450 = vpop.f32.mrb[0].mxu0
      %v451 = vpop.f32.mrb[0].mxu0
      %v452 = vadd.f32 %v321, %v451
      %v453 = vpop.f32.mrb[0].mxu0
      %454 = vmatprep.mubr.bf16.mxu0 0
      %455 = vmatmul.mubr.bf16.gmra.mrb[0].mxu0 %v358
      %v456 = vpop.f32.mrb[0].mxu0
      %v457 = vadd.f32 %v321, %v456
      %v458 = vpop.f32.mrb[0].mxu0
      %v459 = vpop.f32.mrb[0].mxu0
      %v460 = vadd.f32 %v321, %v459
      %v461 = vpop.f32.mrb[0].mxu0
      %462 = vmatprep.mubr.bf16.mxu0 0
      %463 = vmatmul.mubr.bf16.gmra.mrb[0].mxu0 %v361
      %v464 = vpop.f32.mrb[0].mxu0
      %v465 = vadd.f32 %v321, %v464
      %v466 = vpop.f32.mrb[0].mxu0
      %v467 = vpop.f32.mrb[0].mxu0
      %v468 = vadd.f32 %v321, %v467
      %v469 = vpop.f32.mrb[0].mxu0
      %470 = vmatprep.mubr.bf16.mxu0 0
      %471 = vmatmul.mubr.bf16.gmra.mrb[0].mxu0 %v364
      %v472 = vpop.f32.mrb[0].mxu0
      %v473 = vadd.f32 %v321, %v472
      %v474 = vpop.f32.mrb[0].mxu0
      %v475 = vpop.f32.mrb[0].mxu0
      %v476 = vpop.f32.mrb[0].mxu0
      %477 = vdwg.mxu0
      %v478 = vmax.f32 %v401, 0.0
      %v479 = vmax.f32 %v404, 0.0
      %v480 = vmax.f32 %v409, 0.0
      %v481 = vmax.f32 %v412, 0.0
      %v482 = vmax.f32 %v417, 0.0
      %v483 = vmax.f32 %v420, 0.0
      %v484 = vmax.f32 %v425, 0.0
      %v485 = vmax.f32 %v428, 0.0
      %v486 = vmax.f32 %v433, 0.0
      %v487 = vmax.f32 %v436, 0.0
      %v488 = vmax.f32 %v441, 0.0
      %v489 = vmax.f32 %v444, 0.0
      %v490 = vmax.f32 %v449, 0.0
      %v491 = vmax.f32 %v452, 0.0
      %v492 = vmax.f32 %v457, 0.0
      %v493 = vmax.f32 %v460, 0.0
      %v494 = vmax.f32 %v465, 0.0
      %v495 = vmax.f32 %v468, 0.0
      %v496 = vmax.f32 %v473, 0.0
      %v497 = vpack.c.bf16 %v479, %v478
      %v498 = vpack.c.bf16 %v481, %v480
      %v499 = vpack.c.bf16 %v483, %v482
      %v500 = vpack.c.bf16 %v485, %v484
      %v501 = vpack.c.bf16 %v487, %v486
      %v502 = vpack.c.bf16 %v489, %v488
      %v503 = vpack.c.bf16 %v491, %v490
      %v504 = vpack.c.bf16 %v493, %v492
      %v505 = vpack.c.bf16 %v495, %v494
      %v506 = vpack.c.bf16 %v496, %v496
      %v507 = vld [vmem:[%s3] sm:$0xff]
      %v508 = vld [vmem:[%s3 + $0x8] sm:$0xff]
      %v509 = vld [vmem:[%s3 + $0x10] sm:$0xff]
      %v510 = vld [vmem:[%s3 + $0x18] sm:$0xff]
      %v511 = vld [vmem:[%s3 + $0x20] sm:$0xff]
      %v512 = vld [vmem:[%s3 + $0x28] sm:$0xff]
      %v513 = vld [vmem:[%s3 + $0x30] sm:$0xff]
      %v514 = vld [vmem:[%s3 + $0x38] sm:$0xff]
      %v515 = vld [vmem:[%s3 + $0x40] sm:$0xff]
      %v516 = vld [vmem:[%s3 + $0x48] sm:$0xff]
      %v517 = vld [vmem:[%s3 + $0x50] sm:$0xff]
      %v518 = vld [vmem:[%s3 + $0x58] sm:$0xff]
      %v519 = vld [vmem:[%s3 + $0x60] sm:$0xff]
      %v520 = vld [vmem:[%s3 + $0x68] sm:$0xff]
      %v521 = vld [vmem:[%s3 + $0x70] sm:$0xff]
      %v522 = vld [vmem:[%s3 + $0x78] sm:$0xff]
      %v523 = vld [vmem:[%s4] sm:$0x3]
      %v525 = vlaneseq
      %v526 = vshrl.u32 %v525, 7
      %v527 = vsub.s32 0, %v526
      %v528 = vrot.slane %v523, %v527
      %v529 = vlaneseq
      %v530 = vshrl.u32 %v529, 7
      %v531 = vsub.s32 1, %v530
      %v532 = vrot.slane %v523, %v531
      %v551 = vunpack.c.l.b16 %v507
      %v552 = vunpack.c.h.b16 %v507
      %v553 = vunpack.c.l.b16 %v508
      %v554 = vunpack.c.h.b16 %v508
      %v555 = vunpack.c.l.b16 %v509
      %v556 = vunpack.c.h.b16 %v509
      %v557 = vunpack.c.l.b16 %v510
      %v558 = vunpack.c.h.b16 %v510
      %v559 = vunpack.c.l.b16 %v511
      %v560 = vunpack.c.h.b16 %v511
      %v561 = vunpack.c.l.b16 %v512
      %v562 = vunpack.c.h.b16 %v512
      %v563 = vunpack.c.l.b16 %v513
      %v564 = vunpack.c.h.b16 %v513
      %v565 = vunpack.c.l.b16 %v514
      %v566 = vunpack.c.h.b16 %v514
      %v567 = vunpack.c.l.b16 %v515
      %v568 = vunpack.c.h.b16 %v515
      %v569 = vunpack.c.l.b16 %v516
      %v570 = vunpack.c.h.b16 %v516
      %v571 = vunpack.c.l.b16 %v517
      %v572 = vunpack.c.h.b16 %v517
      %v573 = vunpack.c.l.b16 %v518
      %v574 = vunpack.c.h.b16 %v518
      %v575 = vunpack.c.l.b16 %v519
      %v576 = vunpack.c.h.b16 %v519
      %v577 = vunpack.c.l.b16 %v520
      %v578 = vunpack.c.h.b16 %v520
      %v579 = vunpack.c.l.b16 %v521
      %v580 = vunpack.c.h.b16 %v521
      %v581 = vunpack.c.l.b16 %v522
      %v582 = vunpack.c.h.b16 %v522
      %v583 = vpack.c.b16 %v553, %v551
      %v584 = vpack.c.b16 %v554, %v552
      %v585 = vpack.c.b16 %v557, %v555
      %v586 = vpack.c.b16 %v558, %v556
      %v587 = vpack.c.b16 %v561, %v559
      %v588 = vpack.c.b16 %v562, %v560
      %v589 = vpack.c.b16 %v565, %v563
      %v590 = vpack.c.b16 %v566, %v564
      %v591 = vpack.c.b16 %v569, %v567
      %v592 = vpack.c.b16 %v570, %v568
      %v593 = vpack.c.b16 %v573, %v571
      %v594 = vpack.c.b16 %v574, %v572
      %v595 = vpack.c.b16 %v577, %v575
      %v596 = vpack.c.b16 %v578, %v576
      %v597 = vpack.c.b16 %v581, %v579
      %v598 = vpack.c.b16 %v582, %v580
      %615 = vmatprep.subr.bf16.mxu0 %v584
      %616 = vmatpush1.bf16.msra.mxu0 %v583
      %617 = vmatprep.subr.bf16.mxu0 %v586
      %618 = vmatpush1.bf16.msra.mxu0 %v585
      %619 = vmatprep.subr.bf16.mxu0 %v588
      %620 = vmatpush1.bf16.msra.mxu0 %v587
      %621 = vmatprep.subr.bf16.mxu0 %v590
      %622 = vmatpush1.bf16.msra.mxu0 %v589
      %623 = vmatprep.subr.bf16.mxu0 %v592
      %624 = vmatpush1.bf16.msra.mxu0 %v591
      %625 = vmatprep.subr.bf16.mxu0 %v594
      %626 = vmatpush1.bf16.msra.mxu0 %v593
      %627 = vmatprep.subr.bf16.mxu0 %v596
      %628 = vmatpush1.bf16.msra.mxu0 %v595
      %629 = vmatprep.subr.bf16.mxu0 %v598
      %630 = vmatpush1.bf16.msra.mxu0 %v597
      %631 = vmatprep.subr.bf16.mxu0 0
      %632 = vmatpush1.bf16.msra.mxu0 0
      %633 = vmatprep.subr.bf16.mxu0 0
      %634 = vmatpush1.bf16.msra.mxu0 0
      %635 = vmatprep.subr.bf16.mxu0 0
      %636 = vmatpush1.bf16.msra.mxu0 0
      %637 = vmatprep.subr.bf16.mxu0 0
      %638 = vmatpush1.bf16.msra.mxu0 0
      %639 = vmatprep.subr.bf16.mxu0 0
      %640 = vmatpush1.bf16.msra.mxu0 0
      %641 = vmatprep.subr.bf16.mxu0 0
      %642 = vmatpush1.bf16.msra.mxu0 0
      %643 = vmatprep.subr.bf16.mxu0 0
      %644 = vmatpush1.bf16.msra.mxu0 0
      %645 = vmatprep.subr.bf16.mxu0 0
      %646 = vmatpush1.bf16.msra.mxu0 0
      %647 = vmatprep.mubr.bf16.mxu0 0
      %648 = vmatmul.mubr.bf16.gmra.mrb[0].mxu0 %v497
      %v649 = vpop.f32.mrb[0].mxu0
      %v650 = vadd.f32 %v528, %v649
      %v651 = vpop.f32.mrb[0].mxu0
      %v652 = vadd.f32 %v532, %v651
      %v653 = vpop.f32.mrb[0].mxu0
      %v654 = vadd.f32 %v528, %v653
      %v655 = vpop.f32.mrb[0].mxu0
      %v656 = vadd.f32 %v532, %v655
      %657 = vmatprep.mubr.bf16.mxu0 0
      %658 = vmatmul.mubr.bf16.gmra.mrb[0].mxu0 %v498
      %v659 = vpop.f32.mrb[0].mxu0
      %v660 = vadd.f32 %v528, %v659
      %v661 = vpop.f32.mrb[0].mxu0
      %v662 = vadd.f32 %v532, %v661
      %v663 = vpop.f32.mrb[0].mxu0
      %v664 = vadd.f32 %v528, %v663
      %v665 = vpop.f32.mrb[0].mxu0
      %v666 = vadd.f32 %v532, %v665
      %667 = vmatprep.mubr.bf16.mxu0 0
      %668 = vmatmul.mubr.bf16.gmra.mrb[0].mxu0 %v499
      %v669 = vpop.f32.mrb[0].mxu0
      %v670 = vadd.f32 %v528, %v669
      %v671 = vpop.f32.mrb[0].mxu0
      %v672 = vadd.f32 %v532, %v671
      %v673 = vpop.f32.mrb[0].mxu0
      %v674 = vadd.f32 %v528, %v673
      %v675 = vpop.f32.mrb[0].mxu0
      %v676 = vadd.f32 %v532, %v675
      %677 = vmatprep.mubr.bf16.mxu0 0
      %678 = vmatmul.mubr.bf16.gmra.mrb[0].mxu0 %v500
      %v679 = vpop.f32.mrb[0].mxu0
      %v680 = vadd.f32 %v528, %v679
      %v681 = vpop.f32.mrb[0].mxu0
      %v682 = vadd.f32 %v532, %v681
      %v683 = vpop.f32.mrb[0].mxu0
      %v684 = vadd.f32 %v528, %v683
      %v685 = vpop.f32.mrb[0].mxu0
      %v686 = vadd.f32 %v532, %v685
      %687 = vmatprep.mubr.bf16.mxu0 0
      %688 = vmatmul.mubr.bf16.gmra.mrb[0].mxu0 %v501
      %v689 = vpop.f32.mrb[0].mxu0
      %v690 = vadd.f32 %v528, %v689
      %v691 = vpop.f32.mrb[0].mxu0
      %v692 = vadd.f32 %v532, %v691
      %v693 = vpop.f32.mrb[0].mxu0
      %v694 = vadd.f32 %v528, %v693
      %v695 = vpop.f32.mrb[0].mxu0
      %v696 = vadd.f32 %v532, %v695
      %697 = vmatprep.mubr.bf16.mxu0 0
      %698 = vmatmul.mubr.bf16.gmra.mrb[0].mxu0 %v502
      %v699 = vpop.f32.mrb[0].mxu0
      %v700 = vadd.f32 %v528, %v699
      %v701 = vpop.f32.mrb[0].mxu0
      %v702 = vadd.f32 %v532, %v701
      %v703 = vpop.f32.mrb[0].mxu0
      %v704 = vadd.f32 %v528, %v703
      %v705 = vpop.f32.mrb[0].mxu0
      %v706 = vadd.f32 %v532, %v705
      %707 = vmatprep.mubr.bf16.mxu0 0
      %708 = vmatmul.mubr.bf16.gmra.mrb[0].mxu0 %v503
      %v709 = vpop.f32.mrb[0].mxu0
      %v710 = vadd.f32 %v528, %v709
      %v711 = vpop.f32.mrb[0].mxu0
      %v712 = vadd.f32 %v532, %v711
      %v713 = vpop.f32.mrb[0].mxu0
      %v714 = vadd.f32 %v528, %v713
      %v715 = vpop.f32.mrb[0].mxu0
      %v716 = vadd.f32 %v532, %v715
      %717 = vmatprep.mubr.bf16.mxu0 0
      %718 = vmatmul.mubr.bf16.gmra.mrb[0].mxu0 %v504
      %v719 = vpop.f32.mrb[0].mxu0
      %v720 = vadd.f32 %v528, %v719
      %v721 = vpop.f32.mrb[0].mxu0
      %v722 = vadd.f32 %v532, %v721
      %v723 = vpop.f32.mrb[0].mxu0
      %v724 = vadd.f32 %v528, %v723
      %v725 = vpop.f32.mrb[0].mxu0
      %v726 = vadd.f32 %v532, %v725
      %727 = vmatprep.mubr.bf16.mxu0 0
      %728 = vmatmul.mubr.bf16.gmra.mrb[0].mxu0 %v505
      %v729 = vpop.f32.mrb[0].mxu0
      %v730 = vadd.f32 %v528, %v729
      %v731 = vpop.f32.mrb[0].mxu0
      %v732 = vadd.f32 %v532, %v731
      %v733 = vpop.f32.mrb[0].mxu0
      %v734 = vadd.f32 %v528, %v733
      %v735 = vpop.f32.mrb[0].mxu0
      %v736 = vadd.f32 %v532, %v735
      %737 = vmatprep.mubr.bf16.mxu0 0
      %738 = vmatmul.mubr.bf16.gmra.mrb[0].mxu0 %v506
      %v739 = vpop.f32.mrb[0].mxu0
      %v740 = vadd.f32 %v528, %v739
      %v741 = vpop.f32.mrb[0].mxu0
      %v742 = vadd.f32 %v532, %v741
      %v743 = vpop.f32.mrb[0].mxu0
      %v744 = vpop.f32.mrb[0].mxu0
      %745 = vdwg.mxu0
      %v746 = vmax.f32 %v650, 0.0
      %v747 = vmax.f32 %v652, 0.0
      %v748 = vmax.f32 %v654, 0.0
      %v749 = vmax.f32 %v656, 0.0
      %v750 = vmax.f32 %v660, 0.0
      %v751 = vmax.f32 %v662, 0.0
      %v752 = vmax.f32 %v664, 0.0
      %v753 = vmax.f32 %v666, 0.0
      %v754 = vmax.f32 %v670, 0.0
      %v755 = vmax.f32 %v672, 0.0
      %v756 = vmax.f32 %v674, 0.0
      %v757 = vmax.f32 %v676, 0.0
      %v758 = vmax.f32 %v680, 0.0
      %v759 = vmax.f32 %v682, 0.0
      %v760 = vmax.f32 %v684, 0.0
      %v761 = vmax.f32 %v686, 0.0
      %v762 = vmax.f32 %v690, 0.0
      %v763 = vmax.f32 %v692, 0.0
      %v764 = vmax.f32 %v694, 0.0
      %v765 = vmax.f32 %v696, 0.0
      %v766 = vmax.f32 %v700, 0.0
      %v767 = vmax.f32 %v702, 0.0
      %v768 = vmax.f32 %v704, 0.0
      %v769 = vmax.f32 %v706, 0.0
      %v770 = vmax.f32 %v710, 0.0
      %v771 = vmax.f32 %v712, 0.0
      %v772 = vmax.f32 %v714, 0.0
      %v773 = vmax.f32 %v716, 0.0
      %v774 = vmax.f32 %v720, 0.0
      %v775 = vmax.f32 %v722, 0.0
      %v776 = vmax.f32 %v724, 0.0
      %v777 = vmax.f32 %v726, 0.0
      %v778 = vmax.f32 %v730, 0.0
      %v779 = vmax.f32 %v732, 0.0
      %v780 = vmax.f32 %v734, 0.0
      %v781 = vmax.f32 %v736, 0.0
      %v782 = vmax.f32 %v740, 0.0
      %v783 = vmax.f32 %v742, 0.0
      %v784 = vpack.c.bf16 %v748, %v746
      %v785 = vpack.c.bf16 %v749, %v747
      %v786 = vpack.c.bf16 %v752, %v750
      %v787 = vpack.c.bf16 %v753, %v751
      %v788 = vpack.c.bf16 %v756, %v754
      %v789 = vpack.c.bf16 %v757, %v755
      %v790 = vpack.c.bf16 %v760, %v758
      %v791 = vpack.c.bf16 %v761, %v759
      %v792 = vpack.c.bf16 %v764, %v762
      %v793 = vpack.c.bf16 %v765, %v763
      %v794 = vpack.c.bf16 %v768, %v766
      %v795 = vpack.c.bf16 %v769, %v767
      %v796 = vpack.c.bf16 %v772, %v770
      %v797 = vpack.c.bf16 %v773, %v771
      %v798 = vpack.c.bf16 %v776, %v774
      %v799 = vpack.c.bf16 %v777, %v775
      %v800 = vpack.c.bf16 %v780, %v778
      %v801 = vpack.c.bf16 %v781, %v779
      %v802 = vpack.c.bf16 %v782, %v782
      %v803 = vpack.c.bf16 %v783, %v783
      %v804 = vld [vmem:[%s5] sm:$0xf]
      %v805 = vld [vmem:[%s5 + $0x4] sm:$0xf]
      %v806 = vld [vmem:[%s5 + $0x8] sm:$0xf]
      %v807 = vld [vmem:[%s5 + $0xc] sm:$0xf]
      %v808 = vld [vmem:[%s5 + $0x10] sm:$0xf]
      %v809 = vld [vmem:[%s5 + $0x14] sm:$0xf]
      %v810 = vld [vmem:[%s5 + $0x18] sm:$0xf]
      %v811 = vld [vmem:[%s5 + $0x1c] sm:$0xf]
      %v812 = vld [vmem:[%s5 + $0x20] sm:$0xf]
      %v813 = vld [vmem:[%s5 + $0x24] sm:$0xf]
      %v814 = vld [vmem:[%s5 + $0x28] sm:$0xf]
      %v815 = vld [vmem:[%s5 + $0x2c] sm:$0xf]
      %v816 = vld [vmem:[%s5 + $0x30] sm:$0xf]
      %v817 = vld [vmem:[%s5 + $0x34] sm:$0xf]
      %v818 = vld [vmem:[%s5 + $0x38] sm:$0xf]
      %v819 = vld [vmem:[%s5 + $0x3c] sm:$0xf]
      %v820 = vld [vmem:[%s5 + $0x40] sm:$0xf]
      %v821 = vld [vmem:[%s5 + $0x44] sm:$0xf]
      %v822 = vld [vmem:[%s5 + $0x48] sm:$0xf]
      %v823 = vld [vmem:[%s5 + $0x4c] sm:$0xf]
      %v824 = vld [vmem:[%s5 + $0x50] sm:$0xf]
      %v825 = vld [vmem:[%s5 + $0x54] sm:$0xf]
      %v826 = vld [vmem:[%s5 + $0x58] sm:$0xf]
      %v827 = vld [vmem:[%s5 + $0x5c] sm:$0xf]
      %v828 = vld [vmem:[%s5 + $0x60] sm:$0xf]
      %v829 = vld [vmem:[%s5 + $0x64] sm:$0xf]
      %v830 = vld [vmem:[%s5 + $0x68] sm:$0xf]
      %v831 = vld [vmem:[%s5 + $0x6c] sm:$0xf]
      %v832 = vld [vmem:[%s5 + $0x70] sm:$0xf]
      %v833 = vld [vmem:[%s5 + $0x74] sm:$0xf]
      %v834 = vld [vmem:[%s5 + $0x78] sm:$0xf]
      %v835 = vld [vmem:[%s5 + $0x7c] sm:$0xf]
      %v836 = vld [vmem:[%s6] sm:$0x1]
      %v838 = vlaneseq
      %v839 = vshrl.u32 %v838, 7
      %v840 = vsub.s32 0, %v839
      %v841 = vrot.slane %v836, %v840
      %v875 = vunpack.c.l.b16 %v804
      %v876 = vunpack.c.l.b16 %v805
      %v877 = vunpack.c.l.b16 %v806
      %v878 = vunpack.c.l.b16 %v807
      %v879 = vunpack.c.l.b16 %v808
      %v880 = vunpack.c.l.b16 %v809
      %v881 = vunpack.c.l.b16 %v810
      %v882 = vunpack.c.l.b16 %v811
      %v883 = vunpack.c.l.b16 %v812
      %v884 = vunpack.c.l.b16 %v813
      %v885 = vunpack.c.l.b16 %v814
      %v886 = vunpack.c.l.b16 %v815
      %v887 = vunpack.c.l.b16 %v816
      %v888 = vunpack.c.l.b16 %v817
      %v889 = vunpack.c.l.b16 %v818
      %v890 = vunpack.c.l.b16 %v819
      %v891 = vunpack.c.l.b16 %v820
      %v892 = vunpack.c.l.b16 %v821
      %v893 = vunpack.c.l.b16 %v822
      %v894 = vunpack.c.l.b16 %v823
      %v895 = vunpack.c.l.b16 %v824
      %v896 = vunpack.c.l.b16 %v825
      %v897 = vunpack.c.l.b16 %v826
      %v898 = vunpack.c.l.b16 %v827
      %v899 = vunpack.c.l.b16 %v828
      %v900 = vunpack.c.l.b16 %v829
      %v901 = vunpack.c.l.b16 %v830
      %v902 = vunpack.c.l.b16 %v831
      %v903 = vunpack.c.l.b16 %v832
      %v904 = vunpack.c.l.b16 %v833
      %v905 = vunpack.c.l.b16 %v834
      %v906 = vunpack.c.l.b16 %v835
      %v907 = vpack.c.b16 %v876, %v875
      %v908 = vpack.c.b16 %v878, %v877
      %v909 = vpack.c.b16 %v880, %v879
      %v910 = vpack.c.b16 %v882, %v881
      %v911 = vpack.c.b16 %v884, %v883
      %v912 = vpack.c.b16 %v886, %v885
      %v913 = vpack.c.b16 %v888, %v887
      %v914 = vpack.c.b16 %v890, %v889
      %v915 = vpack.c.b16 %v892, %v891
      %v916 = vpack.c.b16 %v894, %v893
      %v917 = vpack.c.b16 %v896, %v895
      %v918 = vpack.c.b16 %v898, %v897
      %v919 = vpack.c.b16 %v900, %v899
      %v920 = vpack.c.b16 %v902, %v901
      %v921 = vpack.c.b16 %v904, %v903
      %v922 = vpack.c.b16 %v906, %v905
      %939 = vmatprep.subr.bf16.mxu0 0
      %940 = vmatpush1.bf16.msra.mxu0 %v907
      %941 = vmatprep.subr.bf16.mxu0 0
      %942 = vmatpush1.bf16.msra.mxu0 %v908
      %943 = vmatprep.subr.bf16.mxu0 0
      %944 = vmatpush1.bf16.msra.mxu0 %v909
      %945 = vmatprep.subr.bf16.mxu0 0
      %946 = vmatpush1.bf16.msra.mxu0 %v910
      %947 = vmatprep.subr.bf16.mxu0 0
      %948 = vmatpush1.bf16.msra.mxu0 %v911
      %949 = vmatprep.subr.bf16.mxu0 0
      %950 = vmatpush1.bf16.msra.mxu0 %v912
      %951 = vmatprep.subr.bf16.mxu0 0
      %952 = vmatpush1.bf16.msra.mxu0 %v913
      %953 = vmatprep.subr.bf16.mxu0 0
      %954 = vmatpush1.bf16.msra.mxu0 %v914
      %955 = vmatprep.subr.bf16.mxu0 0
      %956 = vmatpush1.bf16.msra.mxu0 %v915
      %957 = vmatprep.subr.bf16.mxu0 0
      %958 = vmatpush1.bf16.msra.mxu0 %v916
      %959 = vmatprep.subr.bf16.mxu0 0
      %960 = vmatpush1.bf16.msra.mxu0 %v917
      %961 = vmatprep.subr.bf16.mxu0 0
      %962 = vmatpush1.bf16.msra.mxu0 %v918
      %963 = vmatprep.subr.bf16.mxu0 0
      %964 = vmatpush1.bf16.msra.mxu0 %v919
      %965 = vmatprep.subr.bf16.mxu0 0
      %966 = vmatpush1.bf16.msra.mxu0 %v920
      %967 = vmatprep.subr.bf16.mxu0 0
      %968 = vmatpush1.bf16.msra.mxu0 %v921
      %969 = vmatprep.subr.bf16.mxu0 0
      %970 = vmatpush1.bf16.msra.mxu0 %v922
      %971 = vmatprep.mubr.bf16.mxu0 %v785
      %972 = vmatmul.mubr.bf16.gmra.mrb[0].mxu0 %v784
      %v973 = vpop.f32.mrb[0].mxu0
      %v974 = vadd.f32 %v841, %v973
      %v975 = vpop.f32.mrb[0].mxu0
      %v976 = vpop.f32.mrb[0].mxu0
      %v977 = vadd.f32 %v841, %v976
      %v978 = vpop.f32.mrb[0].mxu0
      %979 = vmatprep.mubr.bf16.mxu0 %v787
      %980 = vmatmul.mubr.bf16.gmra.mrb[0].mxu0 %v786
      %v981 = vpop.f32.mrb[0].mxu0
      %v982 = vadd.f32 %v841, %v981
      %v983 = vpop.f32.mrb[0].mxu0
      %v984 = vpop.f32.mrb[0].mxu0
      %v985 = vadd.f32 %v841, %v984
      %v986 = vpop.f32.mrb[0].mxu0
      %987 = vmatprep.mubr.bf16.mxu0 %v789
      %988 = vmatmul.mubr.bf16.gmra.mrb[0].mxu0 %v788
      %v989 = vpop.f32.mrb[0].mxu0
      %v990 = vadd.f32 %v841, %v989
      %v991 = vpop.f32.mrb[0].mxu0
      %v992 = vpop.f32.mrb[0].mxu0
      %v993 = vadd.f32 %v841, %v992
      %v994 = vpop.f32.mrb[0].mxu0
      %995 = vmatprep.mubr.bf16.mxu0 %v791
      %996 = vmatmul.mubr.bf16.gmra.mrb[0].mxu0 %v790
      %v997 = vpop.f32.mrb[0].mxu0
      %v998 = vadd.f32 %v841, %v997
      %v999 = vpop.f32.mrb[0].mxu0
      %v1000 = vpop.f32.mrb[0].mxu0
      %v1001 = vadd.f32 %v841, %v1000
      %v1002 = vpop.f32.mrb[0].mxu0
      %1003 = vmatprep.mubr.bf16.mxu0 %v793
      %1004 = vmatmul.mubr.bf16.gmra.mrb[0].mxu0 %v792
      %v1005 = vpop.f32.mrb[0].mxu0
      %v1006 = vadd.f32 %v841, %v1005
      %v1007 = vpop.f32.mrb[0].mxu0
      %v1008 = vpop.f32.mrb[0].mxu0
      %v1009 = vadd.f32 %v841, %v1008
      %v1010 = vpop.f32.mrb[0].mxu0
      %1011 = vmatprep.mubr.bf16.mxu0 %v795
      %1012 = vmatmul.mubr.bf16.gmra.mrb[0].mxu0 %v794
      %v1013 = vpop.f32.mrb[0].mxu0
      %v1014 = vadd.f32 %v841, %v1013
      %v1015 = vpop.f32.mrb[0].mxu0
      %v1016 = vpop.f32.mrb[0].mxu0
      %v1017 = vadd.f32 %v841, %v1016
      %v1018 = vpop.f32.mrb[0].mxu0
      %1019 = vmatprep.mubr.bf16.mxu0 %v797
      %1020 = vmatmul.mubr.bf16.gmra.mrb[0].mxu0 %v796
      %v1021 = vpop.f32.mrb[0].mxu0
      %v1022 = vadd.f32 %v841, %v1021
      %v1023 = vpop.f32.mrb[0].mxu0
      %v1024 = vpop.f32.mrb[0].mxu0
      %v1025 = vadd.f32 %v841, %v1024
      %v1026 = vpop.f32.mrb[0].mxu0
      %1027 = vmatprep.mubr.bf16.mxu0 %v799
      %1028 = vmatmul.mubr.bf16.gmra.mrb[0].mxu0 %v798
      %v1029 = vpop.f32.mrb[0].mxu0
      %v1030 = vadd.f32 %v841, %v1029
      %v1031 = vpop.f32.mrb[0].mxu0
      %v1032 = vpop.f32.mrb[0].mxu0
      %v1033 = vadd.f32 %v841, %v1032
      %v1034 = vpop.f32.mrb[0].mxu0
      %1035 = vmatprep.mubr.bf16.mxu0 %v801
      %1036 = vmatmul.mubr.bf16.gmra.mrb[0].mxu0 %v800
      %v1037 = vpop.f32.mrb[0].mxu0
      %v1038 = vadd.f32 %v841, %v1037
      %v1039 = vpop.f32.mrb[0].mxu0
      %v1040 = vpop.f32.mrb[0].mxu0
      %v1041 = vadd.f32 %v841, %v1040
      %v1042 = vpop.f32.mrb[0].mxu0
      %1043 = vmatprep.mubr.bf16.mxu0 %v803
      %1044 = vmatmul.mubr.bf16.gmra.mrb[0].mxu0 %v802
      %v1045 = vpop.f32.mrb[0].mxu0
      %v1046 = vadd.f32 %v841, %v1045
      %v1047 = vpop.f32.mrb[0].mxu0
      %v1048 = vpop.f32.mrb[0].mxu0
      %v1049 = vpop.f32.mrb[0].mxu0
      %1050 = vdwg.mxu0
      %v1051 = vtanh.pop %v974
      %v1052 = vtanh.pop %v977
      %v1053 = vtanh.pop %v982
      %v1054 = vtanh.pop %v985
      %v1055 = vtanh.pop %v990
      %v1056 = vtanh.pop %v993
      %v1057 = vtanh.pop %v998
      %v1058 = vtanh.pop %v1001
      %v1059 = vtanh.pop %v1006
      %v1060 = vtanh.pop %v1009
      %v1061 = vtanh.pop %v1014
      %v1062 = vtanh.pop %v1017
      %v1063 = vtanh.pop %v1022
      %v1064 = vtanh.pop %v1025
      %v1065 = vtanh.pop %v1030
      %v1066 = vtanh.pop %v1033
      %v1067 = vtanh.pop %v1038
      %v1068 = vtanh.pop %v1041
      %v1069 = vtanh.pop %v1046
      %vm1070 = vcmask 523264
      %1071 = vst.msk [vmem:[%s280] sm:$0xff] %vm1070, %v1051
      %1072 = vst.msk [vmem:[%s280 + $0x8] sm:$0xff] %vm1070, %v1052
      %1073 = vst.msk [vmem:[%s280 + $0x10] sm:$0xff] %vm1070, %v1053
      %1074 = vst.msk [vmem:[%s280 + $0x18] sm:$0xff] %vm1070, %v1054
      %1075 = vst.msk [vmem:[%s280 + $0x20] sm:$0xff] %vm1070, %v1055
      %1076 = vst.msk [vmem:[%s280 + $0x28] sm:$0xff] %vm1070, %v1056
      %1077 = vst.msk [vmem:[%s280 + $0x30] sm:$0xff] %vm1070, %v1057
      %1078 = vst.msk [vmem:[%s280 + $0x38] sm:$0xff] %vm1070, %v1058
      %1079 = vst.msk [vmem:[%s280 + $0x40] sm:$0xff] %vm1070, %v1059
      %1080 = vst.msk [vmem:[%s280 + $0x48] sm:$0xff] %vm1070, %v1060
      %1081 = vst.msk [vmem:[%s280 + $0x50] sm:$0xff] %vm1070, %v1061
      %1082 = vst.msk [vmem:[%s280 + $0x58] sm:$0xff] %vm1070, %v1062
      %1083 = vst.msk [vmem:[%s280 + $0x60] sm:$0xff] %vm1070, %v1063
      %1084 = vst.msk [vmem:[%s280 + $0x68] sm:$0xff] %vm1070, %v1064
      %1085 = vst.msk [vmem:[%s280 + $0x70] sm:$0xff] %vm1070, %v1065
      %1086 = vst.msk [vmem:[%s280 + $0x78] sm:$0xff] %vm1070, %v1066
      %1087 = vst.msk [vmem:[%s280 + $0x80] sm:$0xff] %vm1070, %v1067
      %1088 = vst.msk [vmem:[%s280 + $0x88] sm:$0xff] %vm1070, %v1068
      %1089 = vst.msk [vmem:[%s280 + $0x90] sm:$0xff] %vm1070, %v1069
      %s1090 = smul.u32 19, %s18
      %p1091 = scmp.lt.s32.totalorder %s1090, 37
      %s1092 = scalar_select %p1091, %s1090, 37
      %s1093 = smul.addr %s1092, 8
      %s1094 = scalar_lea.vmem %s7, %s1093
      // Predicated region
      $region49: #{tpu_custom_call.1} parent=47 // pred_check
        %p1095 = pneg %p188
      $region50: #{tpu_custom_call.1} parent=47 // pred_check_branch
        %1097 = sbr.rel (%p1095) target = $region52
      $region51: #{tpu_custom_call.1} parent=47 // pred_region
        %s1098 = smul.u32 19, %s18
      $region52: #{tpu_custom_call.1} parent=47 // pred_fallthru
        _
    $region48: #{tpu_custom_call.1} parent=5 // pred_fallthru
      _
    %p1099 = scmp.le.s32.totalorder 2, %s13
    // Predicated region
    $region53: #{tpu_custom_call.1} parent=5 // pred_check
      %p1100 = pneg %p1099
    $region54: #{tpu_custom_call.1} parent=5 // pred_check_branch
      %1102 = sbr.rel (%p1100) target = $region56
    $region55: #{tpu_custom_call.1} parent=5 // pred_region
      %s1103 = ssub.s32 %s13, 2
      // Predicated region
      $region57: #{tpu_custom_call.1} parent=55 // pred_check
        %p1104 = pneg %p194
      $region58: #{tpu_custom_call.1} parent=55 // pred_check_branch
        %1106 = sbr.rel (%p1104) target = $region60
      $region59: #{tpu_custom_call.1} parent=55 // pred_region
        %s1107 = smul.u32 19, %s19
        %p1108 = scmp.lt.s32.totalorder %s1107, 37
        %s1109 = scalar_select %p1108, %s1107, 37
        %s1110 = smul.addr %s1109, 8
        %s1111 = scalar_lea.vmem %s7, %s1110
      $region60: #{tpu_custom_call.1} parent=55 // pred_fallthru
        _
    $region56: #{tpu_custom_call.1} parent=5 // pred_fallthru
      _
  $region6: #{tpu_custom_call.1} parent=0 // loop_footer
    %s17 = sadd.s32 1, %s13
  $region7: #{tpu_custom_call.1} parent=0 // loop_footer_branch
    %12 = sbr.rel target = $region3
  $region8: #{tpu_custom_call.1} parent=0 // loop_exit
    _

</llo_original>
